<compile_context>
chip_gen: v5e
topology: v5e:2x2
jax: 0.10.0
libtpu: 0.0.40
codegen_flags: <defaults>
</compile_context>

<pallas_src>
import jax
import jax.numpy as jnp
from jax import lax
from jax.experimental import pallas as pl
from jax.experimental.pallas import tpu as pltpu


def _make_cbam_kernel(C, D, HW, K, MAPROWS):
    PADK = K // 2
    DHW = D * HW
    TWO_HW = 2 * HW

    def kernel(x_ref, w1_ref, w2_ref, b_ref, o_ref, map_ref, sig_ref):
        xv = x_ref[0].astype(jnp.float32)                       # (C, D*H*W), lane-dense

        # ---------------- Channel attention ----------------
        avg_p = jnp.sum(xv, axis=1, keepdims=True) * (1.0 / DHW)        # (C, 1)
        max_p = jnp.max(xv, axis=1, keepdims=True)                      # (C, 1)  (no padding -> no mask)
        pooled = jnp.concatenate([avg_p, max_p], axis=1)                # (C, 2)

        h = jnp.dot(w1_ref[...], pooled, preferred_element_type=jnp.float32)   # (CrP, 2)
        h = jnp.maximum(h, 0.0)
        h1 = h[:, 0:1] + h[:, 1:2]           # sum after ReLU, before 2nd matmul (exact)
        logits = jnp.dot(w2_ref[...], h1, preferred_element_type=jnp.float32)  # (C, 1)
        scale_c = jax.nn.sigmoid(logits)                                # (C, 1)

        # ---------------- Spatial pooling ----------------
        # y is transient: only used for the two cross-channel reductions, then dies
        # (the final output recomputes x*scale_c instead of keeping y live).
        y = xv * scale_c
        avg_sp = jnp.sum(y, axis=0, keepdims=True) * (1.0 / C)          # (1, D*H*W)
        max_sp = jnp.max(y, axis=0, keepdims=True)                      # (1, D*H*W)

        # Tiny depth-padded 2-channel map buffer: row PADK+d holds depth-slice d,
        # avg in lanes [0, HW), max in lanes [HW, 2*HW); halo rows stay zero.
        map_ref[...] = jnp.zeros((MAPROWS, TWO_HW), jnp.float32)        # ~2 vreg stores
        for d in range(D):
            sl = slice(d * HW, (d + 1) * HW)
            map_ref[pl.ds(PADK + d, 1), pl.ds(0, HW)] = avg_sp[:, sl]
            map_ref[pl.ds(PADK + d, 1), pl.ds(HW, HW)] = max_sp[:, sl]

        # ---------------- 7x7x7 conv on the MXU ----------------
        # One matmul against the banded weight matrix; the (kh, kw) stencil and the
        # H/W zero padding live inside B, the depth shift comes from the kd-offset
        # (aligned, full-lane) slab reads of map_ref.
        lhs = jnp.concatenate(
            [map_ref[pl.ds(kd, D), :] for kd in range(K)], axis=1)      # (D, K*2*HW)
        conv = jnp.dot(lhs, b_ref[...], preferred_element_type=jnp.float32)  # (D, HW)
        sig = jax.nn.sigmoid(conv)

        # Relayout (D, HW) -> (1, D*HW) through a tiny scratch so the final multiply
        # and the output store stay in the lane-dense flat layout.
        for d in range(D):
            sig_ref[pl.ds(0, 1), pl.ds(d * HW, HW)] = sig[d:d + 1, :]
        sig_flat = sig_ref[...]                                         # (1, D*H*W)

        # ---------------- Final per-voxel scaling ----------------
        # Recompute x*scale_c from x_ref (still resident in VMEM) instead of keeping
        # y live across the conv; one full-slab, 128-aligned, unmasked store.
        o_ref[0] = (x_ref[0].astype(jnp.float32) * scale_c * sig_flat).astype(o_ref.dtype)

    return kernel


def cbam_pallas(x, w1, w2, wconv):
    """x: (N, C, D, H, W); w1: (C//r, C); w2: (C, C//r); wconv: (1, 2, K, K, K)."""
    N, C, D, H, W = x.shape
    Cr = w1.shape[0]
    K = wconv.shape[-1]
    PADK = K // 2
    HW = H * W
    DHW = D * HW
    MAPROWS = ((D + K - 1 + 7) // 8) * 8          # depth-padded rows, sublane-rounded

    # Flat, UNPADDED view of the activations (no jnp.pad / slice copies).
    x_flat = x.reshape(N, C, DHW)

    # Channel-MLP weights: plain 2-D matrices, hidden dim zero-padded to a multiple
    # of 8 (exact: ReLU(0) = 0 and zero weights contribute nothing).
    CrP = ((Cr + 7) // 8) * 8
    w1p = jnp.zeros((CrP, C), jnp.float32).at[:Cr, :].set(w1.astype(jnp.float32))
    w2p = jnp.zeros((C, CrP), jnp.float32).at[:, :Cr].set(w2.astype(jnp.float32))

    # Banded conv matrix B[(kd, c, h_in, w_in), (h_out, w_out)]:
    #   wconv[0, c, kd, h_in-h_out+PADK, w_in-w_out+PADK] when both offsets are in
    #   [0, K), else 0.  Out-of-range (h_in, w_in) simply have no row -> implicit
    #   H/W zero padding.  Depth padding is handled by the zero halo rows of the
    #   in-kernel map buffer.  Size: K*2*HW*HW f32 = ~224 KiB for the test shape.
    hi = jnp.arange(H)[:, None, None, None]
    wi = jnp.arange(W)[None, :, None, None]
    ho = jnp.arange(H)[None, None, :, None]
    wo = jnp.arange(W)[None, None, None, :]
    dh = hi - ho + PADK
    dw = wi - wo + PADK
    valid = ((dh >= 0) & (dh < K) & (dw >= 0) & (dw < K)).astype(jnp.float32)  # (H,W,H,W)
    dh_c = jnp.clip(dh, 0, K - 1)
    dw_c = jnp.clip(dw, 0, K - 1)
    wt = wconv[0].astype(jnp.float32)                                   # (2, K, K, K)
    taps = wt[:, :, dh_c, dw_c] * valid[None, None]                     # (2, K, H, W, H, W)
    bmat = jnp.transpose(taps, (1, 0, 2, 3, 4, 5)).reshape(K * 2 * HW, HW)

    kernel = _make_cbam_kernel(C, D, HW, K, MAPROWS)

    flops = N * (8 * C * DHW + 2 * D * HW * (K * 2 * HW) + 4 * CrP * C)
    transcendentals = N * (C + DHW)
    bytes_accessed = (N * 2 * C * DHW * x.dtype.itemsize
                      + bmat.size * 4 + (w1p.size + w2p.size) * 4)

    out_flat = pl.pallas_call(
        kernel,
        out_shape=jax.ShapeDtypeStruct((N, C, DHW), x.dtype),
        grid_spec=pltpu.PrefetchScalarGridSpec(
            num_scalar_prefetch=0,
            grid=(N,),
            in_specs=[
                pl.BlockSpec((1, C, DHW), lambda n: (n, 0, 0)),
                pl.BlockSpec((CrP, C), lambda n: (0, 0)),
                pl.BlockSpec((C, CrP), lambda n: (0, 0)),
                pl.BlockSpec((K * 2 * HW, HW), lambda n: (0, 0)),
            ],
            out_specs=pl.BlockSpec((1, C, DHW), lambda n: (n, 0, 0)),
            scratch_shapes=[
                pltpu.VMEM((MAPROWS, 2 * HW), jnp.float32),   # depth-padded avg/max maps
                pltpu.VMEM((1, DHW), jnp.float32),            # flat sigmoid map
            ],
        ),
        compiler_params=pltpu.CompilerParams(
            dimension_semantics=("parallel",),
            vmem_limit_bytes=32 * 1024 * 1024,
        ),
        cost_estimate=pl.CostEstimate(
            flops=flops,
            transcendentals=transcendentals,
            bytes_accessed=bytes_accessed),
    )(x_flat, w1p, w2p, bmat)

    # Pure metadata reshape back to NCDHW (no padding columns to strip).
    return out_flat.reshape(N, C, D, H, W)


def cbam_reference(x, w1, w2, wconv):
    """Pure-JAX reference matching the PyTorch module semantics."""
    N, C, D, H, W = x.shape
    K = wconv.shape[-1]
    pad = K // 2
    hi = lax.Precision.HIGHEST

    avg_p = jnp.mean(x, axis=(2, 3, 4))                        # (N, C)
    max_p = jnp.max(x, axis=(2, 3, 4))                         # (N, C)

    def fc(p):
        h = jnp.maximum(jnp.einsum('nc,rc->nr', p, w1, precision=hi), 0.0)
        return jnp.einsum('nr,cr->nc', h, w2, precision=hi)

    scale_c = jax.nn.sigmoid(fc(avg_p) + fc(max_p))[:, :, None, None, None]
    y = x * scale_c

    avg_s = jnp.mean(y, axis=1, keepdims=True)
    max_s = jnp.max(y, axis=1, keepdims=True)
    cat = jnp.concatenate([avg_s, max_s], axis=1)              # (N, 2, D, H, W)
    conv = lax.conv_general_dilated(
        cat, wconv, window_strides=(1, 1, 1),
        padding=[(pad, pad)] * 3,
        dimension_numbers=('NCDHW', 'OIDHW', 'NCDHW'),
        precision=hi)
    return y * jax.nn.sigmoid(conv)


if __name__ == "__main__":
    N, C, D, H, W = 2, 32, 8, 8, 8
    reduction, K = 16, 7
    Cr = C // reduction

    key = jax.random.PRNGKey(0)
    k1, k2, k3, k4 = jax.random.split(key, 4)
    x = jax.random.normal(k1, (N, C, D, H, W), jnp.float32)
    w1 = jax.random.normal(k2, (Cr, C), jnp.float32) * 0.2      # Conv3d(C, C//r, 1, bias=False)
    w2 = jax.random.normal(k3, (C, Cr), jnp.float32) * 0.2      # Conv3d(C//r, C, 1, bias=False)
    wconv = jax.random.normal(k4, (1, 2, K, K, K), jnp.float32) * 0.05  # Conv3d(2, 1, 7, pad=3, bias=False)

    out = cbam_pallas(x, w1, w2, wconv)
    out = jax.block_until_ready(out)

    ref = cbam_reference(x, w1, w2, wconv)
    assert out.shape == x.shape
    # f32 operands with f32 accumulation everywhere; 1e-3 leaves margin for
    # MXU multi-pass rounding on the 896-term conv contraction.
    max_err = float(jnp.max(jnp.abs(out - ref)))
    if not (max_err < 1e-3):
        raise AssertionError(f"kernel/reference mismatch, max abs err = {max_err}")

    print("KERNEL_OK")
</pallas_src>

<mosaic_0001>
module attributes {stable_mosaic.version = 11 : i64} {
  func.func @kernel(%arg0: i32, %arg1: memref<1x32x512xf32, #tpu.memory_space<vmem>>, %arg2: memref<8x32xf32, #tpu.memory_space<vmem>>, %arg3: memref<32x8xf32, #tpu.memory_space<vmem>>, %arg4: memref<896x64xf32, #tpu.memory_space<vmem>>, %arg5: memref<1x32x512xf32, #tpu.memory_space<vmem>>, %arg6: memref<16x128xf32, #tpu.memory_space<vmem>>, %arg7: memref<1x512xf32, #tpu.memory_space<vmem>>) attributes {dimension_semantics = [#tpu.dimension_semantics<parallel>], iteration_bounds = array<i64: 2>, scalar_prefetch = 0 : i64, scratch_operands = 2 : i64, tpu.core_type = #tpu.core_type<tc>, window_params = [{transform_indices = @transform_0, window_bounds = array<i64: 1, 32, 512>}, {pipeline_mode = #tpu.pipeline_mode<synchronous>, transform_indices = @transform_1, window_bounds = array<i64: 8, 32>}, {pipeline_mode = #tpu.pipeline_mode<synchronous>, transform_indices = @transform_2, window_bounds = array<i64: 32, 8>}, {pipeline_mode = #tpu.pipeline_mode<synchronous>, transform_indices = @transform_3, window_bounds = array<i64: 896, 64>}, {transform_indices = @transform_4, window_bounds = array<i64: 1, 32, 512>}]} {
    %c0 = arith.constant 0 : index
    %c0_0 = arith.constant 0 : index
    %c0_1 = arith.constant 0 : index
    %0 = vector.load %arg1[%c0, %c0_0, %c0_1] : memref<1x32x512xf32, #tpu.memory_space<vmem>>, vector<1x32x512xf32>
    %1 = vector.shape_cast %0 : vector<1x32x512xf32> to vector<32x512xf32>
    %cst = arith.constant dense<0.000000e+00> : vector<32xf32>
    %2 = vector.multi_reduction <add>, %1, %cst [1] : vector<32x512xf32> to vector<32xf32>
    %3 = vector.shape_cast %2 : vector<32xf32> to vector<32x1xf32>
    %cst_2 = arith.constant 0.001953125 : f32
    %4 = vector.broadcast %cst_2 : f32 to vector<32x1xf32>
    %5 = arith.mulf %3, %4 : vector<32x1xf32>
    %cst_3 = arith.constant dense<0xFF800000> : vector<32xf32>
    %6 = vector.multi_reduction <maximumf>, %1, %cst_3 [1] : vector<32x512xf32> to vector<32xf32>
    %7 = vector.shape_cast %6 : vector<32xf32> to vector<32x1xf32>
    %8 = tpu.concatenate %5, %7 in 1 : vector<32x1xf32>, vector<32x1xf32> -> vector<32x2xf32>
    %c0_4 = arith.constant 0 : index
    %c0_5 = arith.constant 0 : index
    %9 = vector.load %arg2[%c0_4, %c0_5] : memref<8x32xf32, #tpu.memory_space<vmem>>, vector<8x32xf32>
    %cst_6 = arith.constant dense<0.000000e+00> : vector<8x2xf32>
    %10 = tpu.matmul %9, %8, %cst_6 {dimension_numbers = #tpu.dot_dimension_numbers<[1], [0], [0], [1], [0, 0, 1, 1], [], []>} : vector<8x32xf32>, vector<32x2xf32>, vector<8x2xf32> -> vector<8x2xf32>
    %cst_7 = arith.constant 0.000000e+00 : f32
    %11 = vector.broadcast %cst_7 : f32 to vector<8x2xf32>
    %12 = arith.maximumf %10, %11 : vector<8x2xf32>
    %13 = vector.extract_strided_slice %12 {offsets = [0, 0], sizes = [8, 1], strides = [1, 1]} : vector<8x2xf32> to vector<8x1xf32>
    %14 = vector.extract_strided_slice %12 {offsets = [0, 1], sizes = [8, 1], strides = [1, 1]} : vector<8x2xf32> to vector<8x1xf32>
    %15 = arith.addf %13, %14 : vector<8x1xf32>
    %c0_8 = arith.constant 0 : index
    %c0_9 = arith.constant 0 : index
    %16 = vector.load %arg3[%c0_8, %c0_9] : memref<32x8xf32, #tpu.memory_space<vmem>>, vector<32x8xf32>
    %cst_10 = arith.constant dense<0.000000e+00> : vector<32x1xf32>
    %17 = tpu.matmul %16, %15, %cst_10 {dimension_numbers = #tpu.dot_dimension_numbers<[1], [0], [0], [1], [0, 0, 1, 1], [], []>} : vector<32x8xf32>, vector<8x1xf32>, vector<32x1xf32> -> vector<32x1xf32>
    %18 = arith.negf %17 : vector<32x1xf32>
    %19 = math.exp %18 : vector<32x1xf32>
    %cst_11 = arith.constant 1.000000e+00 : f32
    %20 = vector.broadcast %cst_11 : f32 to vector<32x1xf32>
    %21 = arith.addf %20, %19 : vector<32x1xf32>
    %22 = arith.divf %20, %21 : vector<32x1xf32>
    %23 = vector.broadcast %22 : vector<32x1xf32> to vector<32x512xf32>
    %24 = arith.mulf %1, %23 : vector<32x512xf32>
    %cst_12 = arith.constant dense<0.000000e+00> : vector<512xf32>
    %25 = vector.multi_reduction <add>, %24, %cst_12 [0] : vector<32x512xf32> to vector<512xf32>
    %26 = vector.shape_cast %25 : vector<512xf32> to vector<1x512xf32>
    %cst_13 = arith.constant 3.125000e-02 : f32
    %27 = vector.broadcast %cst_13 : f32 to vector<1x512xf32>
    %28 = arith.mulf %26, %27 : vector<1x512xf32>
    %cst_14 = arith.constant dense<0xFF800000> : vector<512xf32>
    %29 = vector.multi_reduction <maximumf>, %24, %cst_14 [0] : vector<32x512xf32> to vector<512xf32>
    %30 = vector.shape_cast %29 : vector<512xf32> to vector<1x512xf32>
    %cst_15 = arith.constant 0.000000e+00 : f32
    %31 = vector.broadcast %cst_15 : f32 to vector<16x128xf32>
    %c0_16 = arith.constant 0 : index
    %c0_17 = arith.constant 0 : index
    %32 = vector.load %arg6[%c0_16, %c0_17] : memref<16x128xf32, #tpu.memory_space<vmem>>, vector<16x128xf32>
    tpu.vector_store %arg6[%c0_16, %c0_17], %31 {strides = array<i32>} : memref<16x128xf32, #tpu.memory_space<vmem>>, vector<16x128xf32>,
    %33 = vector.extract_strided_slice %28 {offsets = [0, 0], sizes = [1, 64], strides = [1, 1]} : vector<1x512xf32> to vector<1x64xf32>
    %c3 = arith.constant 3 : index
    %c0_18 = arith.constant 0 : index
    %34 = vector.load %arg6[%c3, %c0_18] : memref<16x128xf32, #tpu.memory_space<vmem>>, vector<1x64xf32>
    tpu.vector_store %arg6[%c3, %c0_18], %33 {strides = array<i32>} : memref<16x128xf32, #tpu.memory_space<vmem>>, vector<1x64xf32>,
    %35 = vector.extract_strided_slice %30 {offsets = [0, 0], sizes = [1, 64], strides = [1, 1]} : vector<1x512xf32> to vector<1x64xf32>
    %c3_19 = arith.constant 3 : index
    %c64 = arith.constant 64 : index
    %36 = vector.load %arg6[%c3_19, %c64] : memref<16x128xf32, #tpu.memory_space<vmem>>, vector<1x64xf32>
    tpu.vector_store %arg6[%c3_19, %c64], %35 {strides = array<i32>} : memref<16x128xf32, #tpu.memory_space<vmem>>, vector<1x64xf32>,
    %37 = vector.extract_strided_slice %28 {offsets = [0, 64], sizes = [1, 64], strides = [1, 1]} : vector<1x512xf32> to vector<1x64xf32>
    %c4 = arith.constant 4 : index
    %c0_20 = arith.constant 0 : index
    %38 = vector.load %arg6[%c4, %c0_20] : memref<16x128xf32, #tpu.memory_space<vmem>>, vector<1x64xf32>
    tpu.vector_store %arg6[%c4, %c0_20], %37 {strides = array<i32>} : memref<16x128xf32, #tpu.memory_space<vmem>>, vector<1x64xf32>,
    %39 = vector.extract_strided_slice %30 {offsets = [0, 64], sizes = [1, 64], strides = [1, 1]} : vector<1x512xf32> to vector<1x64xf32>
    %c4_21 = arith.constant 4 : index
    %c64_22 = arith.constant 64 : index
    %40 = vector.load %arg6[%c4_21, %c64_22] : memref<16x128xf32, #tpu.memory_space<vmem>>, vector<1x64xf32>
    tpu.vector_store %arg6[%c4_21, %c64_22], %39 {strides = array<i32>} : memref<16x128xf32, #tpu.memory_space<vmem>>, vector<1x64xf32>,
    %41 = vector.extract_strided_slice %28 {offsets = [0, 128], sizes = [1, 64], strides = [1, 1]} : vector<1x512xf32> to vector<1x64xf32>
    %c5 = arith.constant 5 : index
    %c0_23 = arith.constant 0 : index
    %42 = vector.load %arg6[%c5, %c0_23] : memref<16x128xf32, #tpu.memory_space<vmem>>, vector<1x64xf32>
    tpu.vector_store %arg6[%c5, %c0_23], %41 {strides = array<i32>} : memref<16x128xf32, #tpu.memory_space<vmem>>, vector<1x64xf32>,
    %43 = vector.extract_strided_slice %30 {offsets = [0, 128], sizes = [1, 64], strides = [1, 1]} : vector<1x512xf32> to vector<1x64xf32>
    %c5_24 = arith.constant 5 : index
    %c64_25 = arith.constant 64 : index
    %44 = vector.load %arg6[%c5_24, %c64_25] : memref<16x128xf32, #tpu.memory_space<vmem>>, vector<1x64xf32>
    tpu.vector_store %arg6[%c5_24, %c64_25], %43 {strides = array<i32>} : memref<16x128xf32, #tpu.memory_space<vmem>>, vector<1x64xf32>,
    %45 = vector.extract_strided_slice %28 {offsets = [0, 192], sizes = [1, 64], strides = [1, 1]} : vector<1x512xf32> to vector<1x64xf32>
    %c6 = arith.constant 6 : index
    %c0_26 = arith.constant 0 : index
    %46 = vector.load %arg6[%c6, %c0_26] : memref<16x128xf32, #tpu.memory_space<vmem>>, vector<1x64xf32>
    tpu.vector_store %arg6[%c6, %c0_26], %45 {strides = array<i32>} : memref<16x128xf32, #tpu.memory_space<vmem>>, vector<1x64xf32>,
    %47 = vector.extract_strided_slice %30 {offsets = [0, 192], sizes = [1, 64], strides = [1, 1]} : vector<1x512xf32> to vector<1x64xf32>
    %c6_27 = arith.constant 6 : index
    %c64_28 = arith.constant 64 : index
    %48 = vector.load %arg6[%c6_27, %c64_28] : memref<16x128xf32, #tpu.memory_space<vmem>>, vector<1x64xf32>
    tpu.vector_store %arg6[%c6_27, %c64_28], %47 {strides = array<i32>} : memref<16x128xf32, #tpu.memory_space<vmem>>, vector<1x64xf32>,
    %49 = vector.extract_strided_slice %28 {offsets = [0, 256], sizes = [1, 64], strides = [1, 1]} : vector<1x512xf32> to vector<1x64xf32>
    %c7 = arith.constant 7 : index
    %c0_29 = arith.constant 0 : index
    %50 = vector.load %arg6[%c7, %c0_29] : memref<16x128xf32, #tpu.memory_space<vmem>>, vector<1x64xf32>
    tpu.vector_store %arg6[%c7, %c0_29], %49 {strides = array<i32>} : memref<16x128xf32, #tpu.memory_space<vmem>>, vector<1x64xf32>,
    %51 = vector.extract_strided_slice %30 {offsets = [0, 256], sizes = [1, 64], strides = [1, 1]} : vector<1x512xf32> to vector<1x64xf32>
    %c7_30 = arith.constant 7 : index
    %c64_31 = arith.constant 64 : index
    %52 = vector.load %arg6[%c7_30, %c64_31] : memref<16x128xf32, #tpu.memory_space<vmem>>, vector<1x64xf32>
    tpu.vector_store %arg6[%c7_30, %c64_31], %51 {strides = array<i32>} : memref<16x128xf32, #tpu.memory_space<vmem>>, vector<1x64xf32>,
    %53 = vector.extract_strided_slice %28 {offsets = [0, 320], sizes = [1, 64], strides = [1, 1]} : vector<1x512xf32> to vector<1x64xf32>
    %c8 = arith.constant 8 : index
    %c0_32 = arith.constant 0 : index
    %54 = vector.load %arg6[%c8, %c0_32] : memref<16x128xf32, #tpu.memory_space<vmem>>, vector<1x64xf32>
    tpu.vector_store %arg6[%c8, %c0_32], %53 {strides = array<i32>} : memref<16x128xf32, #tpu.memory_space<vmem>>, vector<1x64xf32>,
    %55 = vector.extract_strided_slice %30 {offsets = [0, 320], sizes = [1, 64], strides = [1, 1]} : vector<1x512xf32> to vector<1x64xf32>
    %c8_33 = arith.constant 8 : index
    %c64_34 = arith.constant 64 : index
    %56 = vector.load %arg6[%c8_33, %c64_34] : memref<16x128xf32, #tpu.memory_space<vmem>>, vector<1x64xf32>
    tpu.vector_store %arg6[%c8_33, %c64_34], %55 {strides = array<i32>} : memref<16x128xf32, #tpu.memory_space<vmem>>, vector<1x64xf32>,
    %57 = vector.extract_strided_slice %28 {offsets = [0, 384], sizes = [1, 64], strides = [1, 1]} : vector<1x512xf32> to vector<1x64xf32>
    %c9 = arith.constant 9 : index
    %c0_35 = arith.constant 0 : index
    %58 = vector.load %arg6[%c9, %c0_35] : memref<16x128xf32, #tpu.memory_space<vmem>>, vector<1x64xf32>
    tpu.vector_store %arg6[%c9, %c0_35], %57 {strides = array<i32>} : memref<16x128xf32, #tpu.memory_space<vmem>>, vector<1x64xf32>,
    %59 = vector.extract_strided_slice %30 {offsets = [0, 384], sizes = [1, 64], strides = [1, 1]} : vector<1x512xf32> to vector<1x64xf32>
    %c9_36 = arith.constant 9 : index
    %c64_37 = arith.constant 64 : index
    %60 = vector.load %arg6[%c9_36, %c64_37] : memref<16x128xf32, #tpu.memory_space<vmem>>, vector<1x64xf32>
    tpu.vector_store %arg6[%c9_36, %c64_37], %59 {strides = array<i32>} : memref<16x128xf32, #tpu.memory_space<vmem>>, vector<1x64xf32>,
    %61 = vector.extract_strided_slice %28 {offsets = [0, 448], sizes = [1, 64], strides = [1, 1]} : vector<1x512xf32> to vector<1x64xf32>
    %c10 = arith.constant 10 : index
    %c0_38 = arith.constant 0 : index
    %62 = vector.load %arg6[%c10, %c0_38] : memref<16x128xf32, #tpu.memory_space<vmem>>, vector<1x64xf32>
    tpu.vector_store %arg6[%c10, %c0_38], %61 {strides = array<i32>} : memref<16x128xf32, #tpu.memory_space<vmem>>, vector<1x64xf32>,
    %63 = vector.extract_strided_slice %30 {offsets = [0, 448], sizes = [1, 64], strides = [1, 1]} : vector<1x512xf32> to vector<1x64xf32>
    %c10_39 = arith.constant 10 : index
    %c64_40 = arith.constant 64 : index
    %64 = vector.load %arg6[%c10_39, %c64_40] : memref<16x128xf32, #tpu.memory_space<vmem>>, vector<1x64xf32>
    tpu.vector_store %arg6[%c10_39, %c64_40], %63 {strides = array<i32>} : memref<16x128xf32, #tpu.memory_space<vmem>>, vector<1x64xf32>,
    %c0_41 = arith.constant 0 : index
    %c0_42 = arith.constant 0 : index
    %65 = vector.load %arg6[%c0_41, %c0_42] : memref<16x128xf32, #tpu.memory_space<vmem>>, vector<8x128xf32>
    %c1 = arith.constant 1 : index
    %c0_43 = arith.constant 0 : index
    %66 = vector.load %arg6[%c1, %c0_43] : memref<16x128xf32, #tpu.memory_space<vmem>>, vector<8x128xf32>
    %c2 = arith.constant 2 : index
    %c0_44 = arith.constant 0 : index
    %67 = vector.load %arg6[%c2, %c0_44] : memref<16x128xf32, #tpu.memory_space<vmem>>, vector<8x128xf32>
    %c3_45 = arith.constant 3 : index
    %c0_46 = arith.constant 0 : index
    %68 = vector.load %arg6[%c3_45, %c0_46] : memref<16x128xf32, #tpu.memory_space<vmem>>, vector<8x128xf32>
    %c4_47 = arith.constant 4 : index
    %c0_48 = arith.constant 0 : index
    %69 = vector.load %arg6[%c4_47, %c0_48] : memref<16x128xf32, #tpu.memory_space<vmem>>, vector<8x128xf32>
    %c5_49 = arith.constant 5 : index
    %c0_50 = arith.constant 0 : index
    %70 = vector.load %arg6[%c5_49, %c0_50] : memref<16x128xf32, #tpu.memory_space<vmem>>, vector<8x128xf32>
    %c6_51 = arith.constant 6 : index
    %c0_52 = arith.constant 0 : index
    %71 = vector.load %arg6[%c6_51, %c0_52] : memref<16x128xf32, #tpu.memory_space<vmem>>, vector<8x128xf32>
    %72 = tpu.concatenate %65, %66, %67, %68, %69, %70, %71 in 1 : vector<8x128xf32>, vector<8x128xf32>, vector<8x128xf32>, vector<8x128xf32>, vector<8x128xf32>, vector<8x128xf32>, vector<8x128xf32> -> vector<8x896xf32>
    %c0_53 = arith.constant 0 : index
    %c0_54 = arith.constant 0 : index
    %73 = vector.load %arg4[%c0_53, %c0_54] : memref<896x64xf32, #tpu.memory_space<vmem>>, vector<896x64xf32>
    %cst_55 = arith.constant dense<0.000000e+00> : vector<8x64xf32>
    %74 = tpu.matmul %72, %73, %cst_55 {dimension_numbers = #tpu.dot_dimension_numbers<[1], [0], [0], [1], [0, 0, 1, 1], [], []>} : vector<8x896xf32>, vector<896x64xf32>, vector<8x64xf32> -> vector<8x64xf32>
    %75 = arith.negf %74 : vector<8x64xf32>
    %76 = math.exp %75 : vector<8x64xf32>
    %cst_56 = arith.constant 1.000000e+00 : f32
    %77 = vector.broadcast %cst_56 : f32 to vector<8x64xf32>
    %78 = arith.addf %77, %76 : vector<8x64xf32>
    %79 = arith.divf %77, %78 : vector<8x64xf32>
    %80 = vector.extract_strided_slice %79 {offsets = [0, 0], sizes = [1, 64], strides = [1, 1]} : vector<8x64xf32> to vector<1x64xf32>
    %c0_57 = arith.constant 0 : index
    %c0_58 = arith.constant 0 : index
    %81 = vector.load %arg7[%c0_57, %c0_58] : memref<1x512xf32, #tpu.memory_space<vmem>>, vector<1x64xf32>
    tpu.vector_store %arg7[%c0_57, %c0_58], %80 {strides = array<i32>} : memref<1x512xf32, #tpu.memory_space<vmem>>, vector<1x64xf32>,
    %82 = vector.extract_strided_slice %79 {offsets = [1, 0], sizes = [1, 64], strides = [1, 1]} : vector<8x64xf32> to vector<1x64xf32>
    %c0_59 = arith.constant 0 : index
    %c64_60 = arith.constant 64 : index
    %83 = vector.load %arg7[%c0_59, %c64_60] : memref<1x512xf32, #tpu.memory_space<vmem>>, vector<1x64xf32>
    tpu.vector_store %arg7[%c0_59, %c64_60], %82 {strides = array<i32>} : memref<1x512xf32, #tpu.memory_space<vmem>>, vector<1x64xf32>,
    %84 = vector.extract_strided_slice %79 {offsets = [2, 0], sizes = [1, 64], strides = [1, 1]} : vector<8x64xf32> to vector<1x64xf32>
    %c0_61 = arith.constant 0 : index
    %c128 = arith.constant 128 : index
    %85 = vector.load %arg7[%c0_61, %c128] : memref<1x512xf32, #tpu.memory_space<vmem>>, vector<1x64xf32>
    tpu.vector_store %arg7[%c0_61, %c128], %84 {strides = array<i32>} : memref<1x512xf32, #tpu.memory_space<vmem>>, vector<1x64xf32>,
    %86 = vector.extract_strided_slice %79 {offsets = [3, 0], sizes = [1, 64], strides = [1, 1]} : vector<8x64xf32> to vector<1x64xf32>
    %c0_62 = arith.constant 0 : index
    %c192 = arith.constant 192 : index
    %87 = vector.load %arg7[%c0_62, %c192] : memref<1x512xf32, #tpu.memory_space<vmem>>, vector<1x64xf32>
    tpu.vector_store %arg7[%c0_62, %c192], %86 {strides = array<i32>} : memref<1x512xf32, #tpu.memory_space<vmem>>, vector<1x64xf32>,
    %88 = vector.extract_strided_slice %79 {offsets = [4, 0], sizes = [1, 64], strides = [1, 1]} : vector<8x64xf32> to vector<1x64xf32>
    %c0_63 = arith.constant 0 : index
    %c256 = arith.constant 256 : index
    %89 = vector.load %arg7[%c0_63, %c256] : memref<1x512xf32, #tpu.memory_space<vmem>>, vector<1x64xf32>
    tpu.vector_store %arg7[%c0_63, %c256], %88 {strides = array<i32>} : memref<1x512xf32, #tpu.memory_space<vmem>>, vector<1x64xf32>,
    %90 = vector.extract_strided_slice %79 {offsets = [5, 0], sizes = [1, 64], strides = [1, 1]} : vector<8x64xf32> to vector<1x64xf32>
    %c0_64 = arith.constant 0 : index
    %c320 = arith.constant 320 : index
    %91 = vector.load %arg7[%c0_64, %c320] : memref<1x512xf32, #tpu.memory_space<vmem>>, vector<1x64xf32>
    tpu.vector_store %arg7[%c0_64, %c320], %90 {strides = array<i32>} : memref<1x512xf32, #tpu.memory_space<vmem>>, vector<1x64xf32>,
    %92 = vector.extract_strided_slice %79 {offsets = [6, 0], sizes = [1, 64], strides = [1, 1]} : vector<8x64xf32> to vector<1x64xf32>
    %c0_65 = arith.constant 0 : index
    %c384 = arith.constant 384 : index
    %93 = vector.load %arg7[%c0_65, %c384] : memref<1x512xf32, #tpu.memory_space<vmem>>, vector<1x64xf32>
    tpu.vector_store %arg7[%c0_65, %c384], %92 {strides = array<i32>} : memref<1x512xf32, #tpu.memory_space<vmem>>, vector<1x64xf32>,
    %94 = vector.extract_strided_slice %79 {offsets = [7, 0], sizes = [1, 64], strides = [1, 1]} : vector<8x64xf32> to vector<1x64xf32>
    %c0_66 = arith.constant 0 : index
    %c448 = arith.constant 448 : index
    %95 = vector.load %arg7[%c0_66, %c448] : memref<1x512xf32, #tpu.memory_space<vmem>>, vector<1x64xf32>
    tpu.vector_store %arg7[%c0_66, %c448], %94 {strides = array<i32>} : memref<1x512xf32, #tpu.memory_space<vmem>>, vector<1x64xf32>,
    %c0_67 = arith.constant 0 : index
    %c0_68 = arith.constant 0 : index
    %96 = vector.load %arg7[%c0_67, %c0_68] : memref<1x512xf32, #tpu.memory_space<vmem>>, vector<1x512xf32>
    %c0_69 = arith.constant 0 : index
    %c0_70 = arith.constant 0 : index
    %c0_71 = arith.constant 0 : index
    %97 = vector.load %arg1[%c0_69, %c0_70, %c0_71] : memref<1x32x512xf32, #tpu.memory_space<vmem>>, vector<1x32x512xf32>
    %98 = vector.shape_cast %97 : vector<1x32x512xf32> to vector<32x512xf32>
    %99 = vector.broadcast %22 : vector<32x1xf32> to vector<32x512xf32>
    %100 = arith.mulf %98, %99 : vector<32x512xf32>
    %101 = vector.broadcast %96 : vector<1x512xf32> to vector<32x512xf32>
    %102 = arith.mulf %100, %101 : vector<32x512xf32>
    %c0_72 = arith.constant 0 : index
    %c0_73 = arith.constant 0 : index
    %c0_74 = arith.constant 0 : index
    %103 = vector.load %arg5[%c0_72, %c0_73, %c0_74] : memref<1x32x512xf32, #tpu.memory_space<vmem>>, vector<1x32x512xf32>
    %104 = vector.shape_cast %103 : vector<1x32x512xf32> to vector<32x512xf32>
    %105 = vector.shape_cast %102 : vector<32x512xf32> to vector<1x32x512xf32>
    tpu.vector_store %arg5[%c0_72, %c0_73, %c0_74], %105 {strides = array<i32>} : memref<1x32x512xf32, #tpu.memory_space<vmem>>, vector<1x32x512xf32>,
    return
  }
  func.func @transform_0(%arg0: i32) -> (i32, i32, i32) {
    %c0_i32 = arith.constant 0 : i32
    %c0_i32_0 = arith.constant 0 : i32
    %c0_i32_1 = arith.constant 0 : i32
    return %arg0, %c0_i32, %c0_i32_0 : i32, i32, i32
  }
  func.func @transform_1(%arg0: i32) -> (i32, i32) {
    %c0_i32 = arith.constant 0 : i32
    %c0_i32_0 = arith.constant 0 : i32
    %c0_i32_1 = arith.constant 0 : i32
    return %c0_i32, %c0_i32_0 : i32, i32
  }
  func.func @transform_2(%arg0: i32) -> (i32, i32) {
    %c0_i32 = arith.constant 0 : i32
    %c0_i32_0 = arith.constant 0 : i32
    %c0_i32_1 = arith.constant 0 : i32
    return %c0_i32, %c0_i32_0 : i32, i32
  }
  func.func @transform_3(%arg0: i32) -> (i32, i32) {
    %c0_i32 = arith.constant 0 : i32
    %c0_i32_0 = arith.constant 0 : i32
    %c0_i32_1 = arith.constant 0 : i32
    return %c0_i32, %c0_i32_0 : i32, i32
  }
  func.func @transform_4(%arg0: i32) -> (i32, i32, i32) {
    %c0_i32 = arith.constant 0 : i32
    %c0_i32_0 = arith.constant 0 : i32
    %c0_i32_1 = arith.constant 0 : i32
    return %arg0, %c0_i32, %c0_i32_0 : i32, i32, i32
  }
}

</mosaic_0001>

<llo_original>
// kernel: tpu_custom_call.1
$region0: #{tpu_custom_call.1}
  #allocation0 [shape = 'u32[]', space=smem, size = 0x4, offset = 0x4, fixed_abs, tag = 'smem constant byte address 0x4 - core index']
  #allocation1 [shape = 'u32[72,128]{1,0:T(1,128)}', space=vmem, size = 0x9000, scoped, tag = 'internal scratch']
  #allocation2 [shape = 'f32[16,128]{1,0:T(8,128)}', space=vmem, size = 0x2000, scoped, tag = 'scratch operand']
  #allocation3 [shape = 'f32[1,512]{1,0:T(1,128)}', space=vmem, size = 0x800, scoped, tag = 'scratch operand']
  %s0 = inlined_call_operand.vmem [shape: f32[2,32,512], index: 0, kind: input, shape index: {}]
  %s1 = inlined_call_operand.vmem [shape: f32[8,32], index: 1, kind: input, shape index: {}]
  %s2 = inlined_call_operand.vmem [shape: f32[32,8], index: 2, kind: input, shape index: {}]
  %s3 = inlined_call_operand.vmem [shape: f32[896,64], index: 3, kind: input, shape index: {}]
  %s4 = inlined_call_operand.hbm [shape: f32[2,32,512], index: 4, kind: output, shape index: {}]
  %s5 = sld [smem:[#allocation0]]
  $region49: #{tpu_custom_call.1} parent=0
    _
  %s7 = ssub.s32 1, %s5
  %s8 = scalar_select 0, %s7, %s5
  $region1: #{tpu_custom_call.1} parent=0
    #allocation4 [shape = 'u8[131072]{0}', space=vmem, size = 0x20000, scoped, tag = 'output window, operand 0']
    #allocation5 [shape = 's32[2]{0}', space=sflag, size = 0x8, scoped, tag = 'scoped memory for tpu_custom_call.1']
    %9 = vsyncpa [#allocation5], 0
    %s10 = scalar_lea.sflag [#allocation5], 1
    %11 = vsyncpa %s10, 0
    loop: start=0, step=1, limit=4
    $region2: #{tpu_custom_call.1} parent=1 // loop_pre_header
      _
    $region3: #{tpu_custom_call.1} parent=1 // loop_header
      %s13 = sphi 0, %s17
      %p14 = scmp.ge.s32.totalorder %s13, 4
      %s23 = sphi 0, %s25
      %s26 = sphi 0, %s23
      %s27 = sphi 0, %s26
      %s43 = sphi 0, %s27
      %s47 = sphi 0, %s47
      %s49 = sphi 0, %s47
      %s50 = sphi 0, %s49
      %s64 = sphi 0, %s50
      %s68 = sphi 0, %s68
      %s70 = sphi 0, %s68
      %s71 = sphi 0, %s70
      %s85 = sphi 0, %s71
      %s89 = sphi 0, %s89
      %s91 = sphi 0, %s89
      %s92 = sphi 0, %s91
      %s106 = sphi 0, %s92
      %s112 = sphi 0, %s114
      %s115 = sphi 0, %s112
      %s116 = sphi 0, %s115
      %s132 = sphi 0, %s116
    $region4: #{tpu_custom_call.1} parent=1 // loop_header_branch
      %16 = sbr.rel (%p14) target = $region8
    $region5: #{tpu_custom_call.1} parent=1 // loop_body
      %s18 = ssub.s32 %s13, 1
      %s19 = ssub.s32 %s13, 2
      %s20 = sadd.s32 %s13, 1
      %s21 = ssub.s32 %s13, %s20
      %p22 = scmp.eq.s32.totalorder %s21, 0
      %s24 = sadd.s32 %s23, 1
      %s25 = scalar_select %p22, %s23, %s24
      %p28 = pneg %p22
      %p29 = scmp.eq.s32.totalorder %s13, 1
      %p30 = por %p28, %p29
      %p31 = scmp.ne.s32.totalorder %s23, %s26
      %p32 = scmp.eq.s32.totalorder %s13, 0
      %p33 = por %p31, %p32
      %p34 = scmp.ne.s32.totalorder %s23, %s26
      %p35 = scmp.eq.s32.totalorder %s18, 1
      %p36 = por %p34, %p35
      %p37 = scmp.ne.s32.totalorder %s26, %s27
      %p38 = scmp.eq.s32.totalorder %s18, 0
      %p39 = por %p37, %p38
      %p40 = scmp.ne.s32.totalorder %s26, %s27
      %p41 = scmp.eq.s32.totalorder %s19, 1
      %p42 = por %p40, %p41
      %p44 = scmp.ne.s32.totalorder %s27, %s43
      %p45 = scmp.eq.s32.totalorder %s19, 0
      %p46 = por %p44, %p45
      %s48 = sadd.s32 %s47, 1
      %p51 = scmp.eq.s32.totalorder %s13, 1
      %p52 = scmp.ne.s32.totalorder %s47, %s49
      %p53 = scmp.eq.s32.totalorder %s13, 0
      %p54 = por %p52, %p53
      %p55 = scmp.ne.s32.totalorder %s47, %s49
      %p56 = scmp.eq.s32.totalorder %s18, 1
      %p57 = por %p55, %p56
      %p58 = scmp.ne.s32.totalorder %s49, %s50
      %p59 = scmp.eq.s32.totalorder %s18, 0
      %p60 = por %p58, %p59
      %p61 = scmp.ne.s32.totalorder %s49, %s50
      %p62 = scmp.eq.s32.totalorder %s19, 1
      %p63 = por %p61, %p62
      %p65 = scmp.ne.s32.totalorder %s50, %s64
      %p66 = scmp.eq.s32.totalorder %s19, 0
      %p67 = por %p65, %p66
      %s69 = sadd.s32 %s68, 1
      %p72 = scmp.eq.s32.totalorder %s13, 1
      %p73 = scmp.ne.s32.totalorder %s68, %s70
      %p74 = scmp.eq.s32.totalorder %s13, 0
      %p75 = por %p73, %p74
      %p76 = scmp.ne.s32.totalorder %s68, %s70
      %p77 = scmp.eq.s32.totalorder %s18, 1
      %p78 = por %p76, %p77
      %p79 = scmp.ne.s32.totalorder %s70, %s71
      %p80 = scmp.eq.s32.totalorder %s18, 0
      %p81 = por %p79, %p80
      %p82 = scmp.ne.s32.totalorder %s70, %s71
      %p83 = scmp.eq.s32.totalorder %s19, 1
      %p84 = por %p82, %p83
      %p86 = scmp.ne.s32.totalorder %s71, %s85
      %p87 = scmp.eq.s32.totalorder %s19, 0
      %p88 = por %p86, %p87
      %s90 = sadd.s32 %s89, 1
      %p93 = scmp.eq.s32.totalorder %s13, 1
      %p94 = scmp.ne.s32.totalorder %s89, %s91
      %p95 = scmp.eq.s32.totalorder %s13, 0
      %p96 = por %p94, %p95
      %p97 = scmp.ne.s32.totalorder %s89, %s91
      %p98 = scmp.eq.s32.totalorder %s18, 1
      %p99 = por %p97, %p98
      %p100 = scmp.ne.s32.totalorder %s91, %s92
      %p101 = scmp.eq.s32.totalorder %s18, 0
      %p102 = por %p100, %p101
      %p103 = scmp.ne.s32.totalorder %s91, %s92
      %p104 = scmp.eq.s32.totalorder %s19, 1
      %p105 = por %p103, %p104
      %p107 = scmp.ne.s32.totalorder %s92, %s106
      %p108 = scmp.eq.s32.totalorder %s19, 0
      %p109 = por %p107, %p108
      %s110 = ssub.s32 %s13, %s20
      %p111 = scmp.eq.s32.totalorder %s110, 0
      %s113 = sadd.s32 %s112, 1
      %s114 = scalar_select %p111, %s112, %s113
      %p117 = pneg %p111
      %p118 = scmp.eq.s32.totalorder %s13, 1
      %p119 = por %p117, %p118
      %p120 = scmp.ne.s32.totalorder %s112, %s115
      %p121 = scmp.eq.s32.totalorder %s13, 0
      %p122 = por %p120, %p121
      %p123 = scmp.ne.s32.totalorder %s112, %s115
      %p124 = scmp.eq.s32.totalorder %s18, 1
      %p125 = por %p123, %p124
      %p126 = scmp.ne.s32.totalorder %s115, %s116
      %p127 = scmp.eq.s32.totalorder %s18, 0
      %p128 = por %p126, %p127
      %p129 = scmp.ne.s32.totalorder %s115, %s116
      %p130 = scmp.eq.s32.totalorder %s19, 1
      %p131 = por %p129, %p130
      %p133 = scmp.ne.s32.totalorder %s116, %s132
      %p134 = scmp.eq.s32.totalorder %s19, 0
      %p135 = por %p133, %p134
      %p136 = scmp.le.s32.totalorder 1, %s13
      %p137 = scmp.lt.s32.totalorder %s13, 3
      %p138 = pnand %p136, %p137
      %p139 = pneg %p138
      // Predicated region
      $region9: #{tpu_custom_call.1} parent=5 // pred_check
        _
      $region10: #{tpu_custom_call.1} parent=5 // pred_check_branch
        %141 = sbr.rel (%p138) target = $region12
      $region11: #{tpu_custom_call.1} parent=5 // pred_region
        %s142 = ssub.s32 %s13, 1
        // Predicated region
        $region13: #{tpu_custom_call.1} parent=11 // pred_check
          %p143 = pneg %p60
        $region14: #{tpu_custom_call.1} parent=11 // pred_check_branch
          %145 = sbr.rel (%p143) target = $region16
        $region15: #{tpu_custom_call.1} parent=11 // pred_region
          _
        $region16: #{tpu_custom_call.1} parent=11 // pred_fallthru
          _
        // Predicated region
        $region17: #{tpu_custom_call.1} parent=11 // pred_check
          %p146 = pneg %p81
        $region18: #{tpu_custom_call.1} parent=11 // pred_check_branch
          %148 = sbr.rel (%p146) target = $region20
        $region19: #{tpu_custom_call.1} parent=11 // pred_region
          _
        $region20: #{tpu_custom_call.1} parent=11 // pred_fallthru
          _
        // Predicated region
        $region21: #{tpu_custom_call.1} parent=11 // pred_check
          %p149 = pneg %p102
        $region22: #{tpu_custom_call.1} parent=11 // pred_check_branch
          %151 = sbr.rel (%p149) target = $region24
        $region23: #{tpu_custom_call.1} parent=11 // pred_region
          _
        $region24: #{tpu_custom_call.1} parent=11 // pred_fallthru
          _
      $region12: #{tpu_custom_call.1} parent=5 // pred_fallthru
        _
      %p152 = scmp.lt.s32.totalorder %s13, 2
      // Predicated region
      $region25: #{tpu_custom_call.1} parent=5 // pred_check
        %p153 = pneg %p152
      $region26: #{tpu_custom_call.1} parent=5 // pred_check_branch
        %155 = sbr.rel (%p153) target = $region28
      $region27: #{tpu_custom_call.1} parent=5 // pred_region
        // Predicated region
        $region29: #{tpu_custom_call.1} parent=27 // pred_check
          %p156 = pneg %p33
        $region30: #{tpu_custom_call.1} parent=27 // pred_check_branch
          %158 = sbr.rel (%p156) target = $region32
        $region31: #{tpu_custom_call.1} parent=27 // pred_region
          %p159 = scmp.lt.s32.totalorder %s13, 1
          %s160 = scalar_select %p159, %s13, 1
          %s161 = smul.addr %s160, 16
          %s162 = smul.addr %s161, 8
          %s163 = scalar_lea.vmem %s0, %s162
        $region32: #{tpu_custom_call.1} parent=27 // pred_fallthru
          _
      $region28: #{tpu_custom_call.1} parent=5 // pred_fallthru
        _
      %p164 = scmp.le.s32.totalorder 1, %s13
      %p165 = scmp.lt.s32.totalorder %s13, 3
      %p166 = pnand %p164, %p165
      %p167 = pneg %p166
      // Predicated region
      $region33: #{tpu_custom_call.1} parent=5 // pred_check
        _
      $region34: #{tpu_custom_call.1} parent=5 // pred_check_branch
        %169 = sbr.rel (%p166) target = $region36
      $region35: #{tpu_custom_call.1} parent=5 // pred_region
        %s170 = ssub.s32 %s13, 1
        %p171 = scmp.lt.s32.totalorder %s18, 1
        %s172 = scalar_select %p171, %s18, 1
        %s173 = smul.addr %s172, 16
        %s174 = smul.addr %s173, 8
        %s175 = scalar_lea.vmem %s0, %s174
        %p176 = pneg %p39
        %p177 = pneg %p36
        %p178 = pneg %p60
        %p179 = pneg %p57
        %p180 = pneg %p81
        %p181 = pneg %p78
        %p182 = pneg %p102
        %p183 = pneg %p99
        %p184 = pneg %p128
        %p185 = pneg %p125
        %s186 = sand.u32 %s115, 1
        %s187 = scalar_lea.sflag [#allocation5], %s186
        %s188 = sand.u32 %s115, 1
        %s189 = smul.addr %s188, 128
        %s190 = scalar_lea.vmem [#allocation4], %s189
        %p191 = scmp.lt.s32.totalorder %s18, 1
        %s192 = scalar_select %p191, %s18, 1
        %s193 = smul.addr %s192, 16
        %s194 = smul.addr %s193, 8
        %s195 = scalar_lea.vmem %s0, %s194
        %v196 = vld [vmem:[%s195] sm:$0xff]
        %v197 = vld [vmem:[%s195 + $0x8] sm:$0xff]
        %v198 = vld [vmem:[%s195 + $0x10] sm:$0xff]
        %v199 = vld [vmem:[%s195 + $0x18] sm:$0xff]
        %v200 = vld [vmem:[%s195 + $0x20] sm:$0xff]
        %v201 = vld [vmem:[%s195 + $0x28] sm:$0xff]
        %v202 = vld [vmem:[%s195 + $0x30] sm:$0xff]
        %v203 = vld [vmem:[%s195 + $0x38] sm:$0xff]
        %v204 = vld [vmem:[%s195 + $0x40] sm:$0xff]
        %v205 = vld [vmem:[%s195 + $0x48] sm:$0xff]
        %v206 = vld [vmem:[%s195 + $0x50] sm:$0xff]
        %v207 = vld [vmem:[%s195 + $0x58] sm:$0xff]
        %v208 = vld [vmem:[%s195 + $0x60] sm:$0xff]
        %v209 = vld [vmem:[%s195 + $0x68] sm:$0xff]
        %v210 = vld [vmem:[%s195 + $0x70] sm:$0xff]
        %v211 = vld [vmem:[%s195 + $0x78] sm:$0xff]
        %v212 = vadd.f32 %v196, %v197
        %v213 = vadd.f32 %v212, %v198
        %v214 = vadd.f32 %v213, %v199
        %215 = vadd.xlane.f32.xlu0 %v214
        %v216 = vpop.xlane.xlu0 %215
        %v217 = vadd.f32 %v200, %v201
        %v218 = vadd.f32 %v217, %v202
        %v219 = vadd.f32 %v218, %v203
        %220 = vadd.xlane.f32.xlu0 %v219
        %v221 = vpop.xlane.xlu0 %220
        %v222 = vadd.f32 %v204, %v205
        %v223 = vadd.f32 %v222, %v206
        %v224 = vadd.f32 %v223, %v207
        %225 = vadd.xlane.f32.xlu0 %v224
        %v226 = vpop.xlane.xlu0 %225
        %v227 = vadd.f32 %v208, %v209
        %v228 = vadd.f32 %v227, %v210
        %v229 = vadd.f32 %v228, %v211
        %230 = vadd.xlane.f32.xlu0 %v229
        %v231 = vpop.xlane.xlu0 %230
        %v232 = vmul.f32 %v216, 0.001953125
        %v233 = vmul.f32 %v221, 0.001953125
        %v234 = vmul.f32 %v226, 0.001953125
        %v235 = vmul.f32 %v231, 0.001953125
        %v236 = vmax.f32 %v196, %v197
        %v237 = vmax.f32 %v236, %v198
        %v238 = vmax.f32 %v237, %v199
        %239 = vmax.xlane.f32.xlu0 %v238
        %v240 = vpop.xlane.xlu0 %239
        %v241 = vmax.f32 %v200, %v201
        %v242 = vmax.f32 %v241, %v202
        %v243 = vmax.f32 %v242, %v203
        %244 = vmax.xlane.f32.xlu0 %v243
        %v245 = vpop.xlane.xlu0 %244
        %v246 = vmax.f32 %v204, %v205
        %v247 = vmax.f32 %v246, %v206
        %v248 = vmax.f32 %v247, %v207
        %249 = vmax.xlane.f32.xlu0 %v248
        %v250 = vpop.xlane.xlu0 %249
        %v251 = vmax.f32 %v208, %v209
        %v252 = vmax.f32 %v251, %v210
        %v253 = vmax.f32 %v252, %v211
        %254 = vmax.xlane.f32.xlu0 %v253
        %v255 = vpop.xlane.xlu0 %254
        %vm256 = vcmask 7168
        %v257 = vsel %vm256, %v232, %v240
        %v258 = vsel %vm256, %v233, %v245
        %v259 = vsel %vm256, %v234, %v250
        %v260 = vsel %vm256, %v235, %v255
        %v261 = vld [vmem:[%s1] sm:$0xff]
        %vm262 = vcmask 261120
        %v264 = vsel %vm262, %v261, 0
        %266 = vmatpush.msra.mxu0 0.0
        %267 = vmatpush.msra.mxu0 0.0
        %268 = vmatpush.msra.mxu0 0.0
        %269 = vmatpush.msra.mxu0 0.0
        %270 = vmatpush.msra.mxu0 0.0
        %271 = vmatpush.msra.mxu0 0.0
        %272 = vmatpush.msra.mxu0 0.0
        %273 = vmatpush.msra.mxu0 0.0
        %274 = vmatpush.msra.mxu0 0.0
        %275 = vmatpush.msra.mxu0 0.0
        %276 = vmatpush.msra.mxu0 0.0
        %277 = vmatpush.msra.mxu0 0.0
        %278 = vmatpush.msra.mxu0 %v260
        %279 = vmatpush.msra.mxu0 %v259
        %280 = vmatpush.msra.mxu0 %v258
        %281 = vmatpush.msra.mxu0 %v257
        %282 = vmatmul.f32.gmra.mxu0 %v264
        %v283 = vpop.f32.mrf.mxu0
        %v284 = vadd.f32 0.0, %v283
        %285 = vdwg.mxu0
        %v286 = vmax.f32 %v284, 0.0
        %288 = vrot.lane.b32.xlu0 %v286, 127
        %v289 = vpop.permute.xlu0 %288
        %v291 = vadd.f32 %v286, %v289
        %v292 = vld [vmem:[%s2] sm:$0xff]
        %v293 = vld [vmem:[%s2 + $0x8] sm:$0xff]
        %v294 = vld [vmem:[%s2 + $0x10] sm:$0xff]
        %v295 = vld [vmem:[%s2 + $0x18] sm:$0xff]
        %vm296 = vcmask 64512
        %v298 = vsel %vm296, %v292, 0
        %v301 = vsel %vm296, %v293, 0
        %v304 = vsel %vm296, %v294, 0
        %v307 = vsel %vm296, %v295, 0
        %309 = vmatpush.msra.mxu0 0.0
        %310 = vmatpush.msra.mxu0 0.0
        %311 = vmatpush.msra.mxu0 0.0
        %312 = vmatpush.msra.mxu0 0.0
        %313 = vmatpush.msra.mxu0 0.0
        %314 = vmatpush.msra.mxu0 0.0
        %315 = vmatpush.msra.mxu0 0.0
        %316 = vmatpush.msra.mxu0 0.0
        %317 = vmatpush.msra.mxu0 0.0
        %318 = vmatpush.msra.mxu0 0.0
        %319 = vmatpush.msra.mxu0 0.0
        %320 = vmatpush.msra.mxu0 0.0
        %321 = vmatpush.msra.mxu0 0.0
        %322 = vmatpush.msra.mxu0 0.0
        %323 = vmatpush.msra.mxu0 0.0
        %324 = vmatpush.msra.mxu0 %v291
        %325 = vmatmul.f32.gmra.mxu0 %v298
        %v326 = vpop.f32.mrf.mxu0
        %v327 = vadd.f32 0.0, %v326
        %328 = vmatmul.f32.gmra.mxu0 %v301
        %v329 = vpop.f32.mrf.mxu0
        %v330 = vadd.f32 0.0, %v329
        %331 = vmatmul.f32.gmra.mxu0 %v304
        %v332 = vpop.f32.mrf.mxu0
        %v333 = vadd.f32 0.0, %v332
        %334 = vmatmul.f32.gmra.mxu0 %v307
        %v335 = vpop.f32.mrf.mxu0
        %v336 = vadd.f32 0.0, %v335
        %337 = vdwg.mxu0
        %v338 = vxor.u32 %v327, 2147483648
        %v339 = vxor.u32 %v330, 2147483648
        %v340 = vxor.u32 %v333, 2147483648
        %v341 = vxor.u32 %v336, 2147483648
        %v342 = vmul.f32 %v338, 1.442695
        %v343 = vpow.pop %v342
        %v344 = vmul.f32 %v339, 1.442695
        %v345 = vpow.pop %v344
        %v346 = vmul.f32 %v340, 1.442695
        %v347 = vpow.pop %v346
        %v348 = vmul.f32 %v341, 1.442695
        %v349 = vpow.pop %v348
        %v350 = vadd.f32 %v343, 1.0
        %v351 = vadd.f32 %v345, 1.0
        %v352 = vadd.f32 %v347, 1.0
        %v353 = vadd.f32 %v349, 1.0
        %v354 = vrcp.pop %v350
        %v355 = vmul.f32 %v350, %v354
        %v356 = vsub.f32 1.0, %v355
        %v357 = vmul.f32 %v354, %v356
        %v358 = vadd.f32 %v354, %v357
        %vm359 = vweird.f32 %v350
        %vm360 = vweird.f32 %v354
        %vm361 = vmor %vm359, %vm360
        %v362 = vsel %vm361, %v354, %v358
        %v363 = vand.u32 2147483647, %v350
        %vm364 = vcmp.eq.f32.partialorder %v363, 8.507059e+37
        %v365 = vand.u32 %v350, 2147483648
        %v366 = vor.u32 1.1754944e-38, %v365
        %v367 = vsel %vm364, %v366, %v362
        %v368 = vmul.f32 1.0, %v367
        %v369 = vrcp.pop %v351
        %v370 = vmul.f32 %v351, %v369
        %v371 = vsub.f32 1.0, %v370
        %v372 = vmul.f32 %v369, %v371
        %v373 = vadd.f32 %v369, %v372
        %vm374 = vweird.f32 %v351
        %vm375 = vweird.f32 %v369
        %vm376 = vmor %vm374, %vm375
        %v377 = vsel %vm376, %v369, %v373
        %v378 = vand.u32 2147483647, %v351
        %vm379 = vcmp.eq.f32.partialorder %v378, 8.507059e+37
        %v380 = vand.u32 %v351, 2147483648
        %v381 = vor.u32 1.1754944e-38, %v380
        %v382 = vsel %vm379, %v381, %v377
        %v383 = vmul.f32 1.0, %v382
        %v384 = vrcp.pop %v352
        %v385 = vmul.f32 %v352, %v384
        %v386 = vsub.f32 1.0, %v385
        %v387 = vmul.f32 %v384, %v386
        %v388 = vadd.f32 %v384, %v387
        %vm389 = vweird.f32 %v352
        %vm390 = vweird.f32 %v384
        %vm391 = vmor %vm389, %vm390
        %v392 = vsel %vm391, %v384, %v388
        %v393 = vand.u32 2147483647, %v352
        %vm394 = vcmp.eq.f32.partialorder %v393, 8.507059e+37
        %v395 = vand.u32 %v352, 2147483648
        %v396 = vor.u32 1.1754944e-38, %v395
        %v397 = vsel %vm394, %v396, %v392
        %v398 = vmul.f32 1.0, %v397
        %v399 = vrcp.pop %v353
        %v400 = vmul.f32 %v353, %v399
        %v401 = vsub.f32 1.0, %v400
        %v402 = vmul.f32 %v399, %v401
        %v403 = vadd.f32 %v399, %v402
        %vm404 = vweird.f32 %v353
        %vm405 = vweird.f32 %v399
        %vm406 = vmor %vm404, %vm405
        %v407 = vsel %vm406, %v399, %v403
        %v408 = vand.u32 2147483647, %v353
        %vm409 = vcmp.eq.f32.partialorder %v408, 8.507059e+37
        %v410 = vand.u32 %v353, 2147483648
        %v411 = vor.u32 1.1754944e-38, %v410
        %v412 = vsel %vm409, %v411, %v407
        %v413 = vmul.f32 1.0, %v412
        %415 = vset.pattern.permute.xlu0 0
        %416 = vperm.xlu0 %415, %v368
        %v417 = vpop.permute.xlu0 %416
        %420 = vset.pattern.permute.xlu0 0
        %421 = vperm.xlu0 %420, %v383
        %v422 = vpop.permute.xlu0 %421
        %425 = vset.pattern.permute.xlu0 0
        %426 = vperm.xlu0 %425, %v398
        %v427 = vpop.permute.xlu0 %426
        %430 = vset.pattern.permute.xlu0 0
        %431 = vperm.xlu0 %430, %v413
        %v432 = vpop.permute.xlu0 %431
        %v434 = vmul.f32 %v196, %v417
        %v435 = vmul.f32 %v197, %v417
        %v436 = vmul.f32 %v198, %v417
        %v437 = vmul.f32 %v199, %v417
        %v438 = vmul.f32 %v200, %v422
        %v439 = vmul.f32 %v201, %v422
        %v440 = vmul.f32 %v202, %v422
        %v441 = vmul.f32 %v203, %v422
        %v442 = vmul.f32 %v204, %v427
        %v443 = vmul.f32 %v205, %v427
        %v444 = vmul.f32 %v206, %v427
        %v445 = vmul.f32 %v207, %v427
        %v446 = vmul.f32 %v208, %v432
        %v447 = vmul.f32 %v209, %v432
        %v448 = vmul.f32 %v210, %v432
        %v449 = vmul.f32 %v211, %v432
        %v450 = vadd.f32 %v434, %v438
        %v451 = vadd.f32 %v450, %v442
        %v452 = vadd.f32 %v451, %v446
        %v453 = vrot.slane %v452, 4
        %v454 = vadd.f32 %v452, %v453
        %v455 = vrot.slane %v454, 2
        %v456 = vadd.f32 %v454, %v455
        %v457 = vrot.slane %v456, 1
        %v458 = vadd.f32 %v456, %v457
        %v459 = vadd.f32 %v435, %v439
        %v460 = vadd.f32 %v459, %v443
        %v461 = vadd.f32 %v460, %v447
        %v462 = vrot.slane %v461, 4
        %v463 = vadd.f32 %v461, %v462
        %v464 = vrot.slane %v463, 2
        %v465 = vadd.f32 %v463, %v464
        %v466 = vrot.slane %v465, 1
        %v467 = vadd.f32 %v465, %v466
        %v468 = vadd.f32 %v436, %v440
        %v469 = vadd.f32 %v468, %v444
        %v470 = vadd.f32 %v469, %v448
        %v471 = vrot.slane %v470, 4
        %v472 = vadd.f32 %v470, %v471
        %v473 = vrot.slane %v472, 2
        %v474 = vadd.f32 %v472, %v473
        %v475 = vrot.slane %v474, 1
        %v476 = vadd.f32 %v474, %v475
        %v477 = vadd.f32 %v437, %v441
        %v478 = vadd.f32 %v477, %v445
        %v479 = vadd.f32 %v478, %v449
        %v480 = vrot.slane %v479, 4
        %v481 = vadd.f32 %v479, %v480
        %v482 = vrot.slane %v481, 2
        %v483 = vadd.f32 %v481, %v482
        %v484 = vrot.slane %v483, 1
        %v485 = vadd.f32 %v483, %v484
        %v486 = vmul.f32 %v458, 0.03125
        %v487 = vmul.f32 %v467, 0.03125
        %v488 = vmul.f32 %v476, 0.03125
        %v489 = vmul.f32 %v485, 0.03125
        %v490 = vmax.f32 %v434, %v438
        %v491 = vmax.f32 %v490, %v442
        %v492 = vmax.f32 %v491, %v446
        %v493 = vrot.slane %v492, 4
        %v494 = vmax.f32 %v492, %v493
        %v495 = vrot.slane %v494, 2
        %v496 = vmax.f32 %v494, %v495
        %v497 = vrot.slane %v496, 1
        %v498 = vmax.f32 %v496, %v497
        %v499 = vmax.f32 %v435, %v439
        %v500 = vmax.f32 %v499, %v443
        %v501 = vmax.f32 %v500, %v447
        %v502 = vrot.slane %v501, 4
        %v503 = vmax.f32 %v501, %v502
        %v504 = vrot.slane %v503, 2
        %v505 = vmax.f32 %v503, %v504
        %v506 = vrot.slane %v505, 1
        %v507 = vmax.f32 %v505, %v506
        %v508 = vmax.f32 %v436, %v440
        %v509 = vmax.f32 %v508, %v444
        %v510 = vmax.f32 %v509, %v448
        %v511 = vrot.slane %v510, 4
        %v512 = vmax.f32 %v510, %v511
        %v513 = vrot.slane %v512, 2
        %v514 = vmax.f32 %v512, %v513
        %v515 = vrot.slane %v514, 1
        %v516 = vmax.f32 %v514, %v515
        %v517 = vmax.f32 %v437, %v441
        %v518 = vmax.f32 %v517, %v445
        %v519 = vmax.f32 %v518, %v449
        %v520 = vrot.slane %v519, 4
        %v521 = vmax.f32 %v519, %v520
        %v522 = vrot.slane %v521, 2
        %v523 = vmax.f32 %v521, %v522
        %v524 = vrot.slane %v523, 1
        %v525 = vmax.f32 %v523, %v524
        %526 = vst [vmem:[#allocation2] sm:$0xff] 0.0
        %527 = vst [vmem:[#allocation2 + $0x8] sm:$0xff] 0.0
        %vm528 = vcmask 516096
        %529 = vst.msk [vmem:[#allocation2 + $0x3] sm:$0x1] %vm528, %v486
        %531 = vrot.lane.b32.xlu0 %v498, 64
        %v532 = vpop.permute.xlu0 %531
        %vm534 = vcmask 1040896
        %535 = vst.msk [vmem:[#allocation2 + $0x3] sm:$0x1] %vm534, %v532
        %537 = vrot.lane.b32.xlu0 %v486, 64
        %v538 = vpop.permute.xlu0 %537
        %540 = vst.msk [vmem:[#allocation2 + $0x4] sm:$0x1] %vm528, %v538
        %541 = vst.msk [vmem:[#allocation2 + $0x4] sm:$0x1] %vm534, %v498
        %542 = vst.msk [vmem:[#allocation2 + $0x5] sm:$0x1] %vm528, %v487
        %544 = vrot.lane.b32.xlu0 %v507, 64
        %v545 = vpop.permute.xlu0 %544
        %547 = vst.msk [vmem:[#allocation2 + $0x5] sm:$0x1] %vm534, %v545
        %549 = vrot.lane.b32.xlu0 %v487, 64
        %v550 = vpop.permute.xlu0 %549
        %552 = vst.msk [vmem:[#allocation2 + $0x6] sm:$0x1] %vm528, %v550
        %553 = vst.msk [vmem:[#allocation2 + $0x6] sm:$0x1] %vm534, %v507
        %554 = vst.msk [vmem:[#allocation2 + $0x7] sm:$0x1] %vm528, %v488
        %556 = vrot.lane.b32.xlu0 %v516, 64
        %v557 = vpop.permute.xlu0 %556
        %559 = vst.msk [vmem:[#allocation2 + $0x7] sm:$0x1] %vm534, %v557
        %561 = vrot.lane.b32.xlu0 %v488, 64
        %v562 = vpop.permute.xlu0 %561
        %564 = vst.msk [vmem:[#allocation2 + $0x8] sm:$0x1] %vm528, %v562
        %565 = vst.msk [vmem:[#allocation2 + $0x8] sm:$0x1] %vm534, %v516
        %566 = vst.msk [vmem:[#allocation2 + $0x9] sm:$0x1] %vm528, %v489
        %568 = vrot.lane.b32.xlu0 %v525, 64
        %v569 = vpop.permute.xlu0 %568
        %571 = vst.msk [vmem:[#allocation2 + $0x9] sm:$0x1] %vm534, %v569
        %573 = vrot.lane.b32.xlu0 %v489, 64
        %v574 = vpop.permute.xlu0 %573
        %576 = vst.msk [vmem:[#allocation2 + $0xa] sm:$0x1] %vm528, %v574
        %577 = vst.msk [vmem:[#allocation2 + $0xa] sm:$0x1] %vm534, %v525
        %v578 = vld [vmem:[#allocation2] sm:$0xff]
        %v579 = vld [vmem:[#allocation2 + $0x1] sm:$0xff]
        %v580 = vld [vmem:[#allocation2 + $0x2] sm:$0xff]
        %v581 = vld [vmem:[#allocation2 + $0x3] sm:$0xff]
        %v582 = vld [vmem:[#allocation2 + $0x4] sm:$0xff]
        %v583 = vld [vmem:[#allocation2 + $0x5] sm:$0xff]
        %v584 = vld [vmem:[#allocation2 + $0x6] sm:$0xff]
        %v585 = vld [vmem:[%s3] sm:$0xff]
        %v586 = vld [vmem:[%s3 + $0x8] sm:$0xff]
        %v587 = vld [vmem:[%s3 + $0x10] sm:$0xff]
        %v588 = vld [vmem:[%s3 + $0x18] sm:$0xff]
        %v589 = vld [vmem:[%s3 + $0x20] sm:$0xff]
        %v590 = vld [vmem:[%s3 + $0x28] sm:$0xff]
        %v591 = vld [vmem:[%s3 + $0x30] sm:$0xff]
        %v592 = vld [vmem:[%s3 + $0x38] sm:$0xff]
        %v593 = vld [vmem:[%s3 + $0x40] sm:$0xff]
        %v594 = vld [vmem:[%s3 + $0x48] sm:$0xff]
        %v595 = vld [vmem:[%s3 + $0x50] sm:$0xff]
        %v596 = vld [vmem:[%s3 + $0x58] sm:$0xff]
        %v597 = vld [vmem:[%s3 + $0x60] sm:$0xff]
        %v598 = vld [vmem:[%s3 + $0x68] sm:$0xff]
        %v599 = vld [vmem:[%s3 + $0x70] sm:$0xff]
        %v600 = vld [vmem:[%s3 + $0x78] sm:$0xff]
        %v601 = vld [vmem:[%s3 + $0x80] sm:$0xff]
        %v602 = vld [vmem:[%s3 + $0x88] sm:$0xff]
        %v603 = vld [vmem:[%s3 + $0x90] sm:$0xff]
        %v604 = vld [vmem:[%s3 + $0x98] sm:$0xff]
        %v605 = vld [vmem:[%s3 + $0xa0] sm:$0xff]
        %v606 = vld [vmem:[%s3 + $0xa8] sm:$0xff]
        %v607 = vld [vmem:[%s3 + $0xb0] sm:$0xff]
        %v608 = vld [vmem:[%s3 + $0xb8] sm:$0xff]
        %v609 = vld [vmem:[%s3 + $0xc0] sm:$0xff]
        %v610 = vld [vmem:[%s3 + $0xc8] sm:$0xff]
        %v611 = vld [vmem:[%s3 + $0xd0] sm:$0xff]
        %v612 = vld [vmem:[%s3 + $0xd8] sm:$0xff]
        %v613 = vld [vmem:[%s3 + $0xe0] sm:$0xff]
        %v614 = vld [vmem:[%s3 + $0xe8] sm:$0xff]
        %v615 = vld [vmem:[%s3 + $0xf0] sm:$0xff]
        %v616 = vld [vmem:[%s3 + $0xf8] sm:$0xff]
        %v617 = vld [vmem:[%s3 + $0x100] sm:$0xff]
        %v618 = vld [vmem:[%s3 + $0x108] sm:$0xff]
        %v619 = vld [vmem:[%s3 + $0x110] sm:$0xff]
        %v620 = vld [vmem:[%s3 + $0x118] sm:$0xff]
        %v621 = vld [vmem:[%s3 + $0x120] sm:$0xff]
        %v622 = vld [vmem:[%s3 + $0x128] sm:$0xff]
        %v623 = vld [vmem:[%s3 + $0x130] sm:$0xff]
        %v624 = vld [vmem:[%s3 + $0x138] sm:$0xff]
        %v625 = vld [vmem:[%s3 + $0x140] sm:$0xff]
        %v626 = vld [vmem:[%s3 + $0x148] sm:$0xff]
        %v627 = vld [vmem:[%s3 + $0x150] sm:$0xff]
        %v628 = vld [vmem:[%s3 + $0x158] sm:$0xff]
        %v629 = vld [vmem:[%s3 + $0x160] sm:$0xff]
        %v630 = vld [vmem:[%s3 + $0x168] sm:$0xff]
        %v631 = vld [vmem:[%s3 + $0x170] sm:$0xff]
        %v632 = vld [vmem:[%s3 + $0x178] sm:$0xff]
        %v633 = vld [vmem:[%s3 + $0x180] sm:$0xff]
        %v634 = vld [vmem:[%s3 + $0x188] sm:$0xff]
        %v635 = vld [vmem:[%s3 + $0x190] sm:$0xff]
        %v636 = vld [vmem:[%s3 + $0x198] sm:$0xff]
        %v637 = vld [vmem:[%s3 + $0x1a0] sm:$0xff]
        %v638 = vld [vmem:[%s3 + $0x1a8] sm:$0xff]
        %v639 = vld [vmem:[%s3 + $0x1b0] sm:$0xff]
        %v640 = vld [vmem:[%s3 + $0x1b8] sm:$0xff]
        %v641 = vld [vmem:[%s3 + $0x1c0] sm:$0xff]
        %v642 = vld [vmem:[%s3 + $0x1c8] sm:$0xff]
        %v643 = vld [vmem:[%s3 + $0x1d0] sm:$0xff]
        %v644 = vld [vmem:[%s3 + $0x1d8] sm:$0xff]
        %v645 = vld [vmem:[%s3 + $0x1e0] sm:$0xff]
        %v646 = vld [vmem:[%s3 + $0x1e8] sm:$0xff]
        %v647 = vld [vmem:[%s3 + $0x1f0] sm:$0xff]
        %v648 = vld [vmem:[%s3 + $0x1f8] sm:$0xff]
        %v649 = vld [vmem:[%s3 + $0x200] sm:$0xff]
        %v650 = vld [vmem:[%s3 + $0x208] sm:$0xff]
        %v651 = vld [vmem:[%s3 + $0x210] sm:$0xff]
        %v652 = vld [vmem:[%s3 + $0x218] sm:$0xff]
        %v653 = vld [vmem:[%s3 + $0x220] sm:$0xff]
        %v654 = vld [vmem:[%s3 + $0x228] sm:$0xff]
        %v655 = vld [vmem:[%s3 + $0x230] sm:$0xff]
        %v656 = vld [vmem:[%s3 + $0x238] sm:$0xff]
        %v657 = vld [vmem:[%s3 + $0x240] sm:$0xff]
        %v658 = vld [vmem:[%s3 + $0x248] sm:$0xff]
        %v659 = vld [vmem:[%s3 + $0x250] sm:$0xff]
        %v660 = vld [vmem:[%s3 + $0x258] sm:$0xff]
        %v661 = vld [vmem:[%s3 + $0x260] sm:$0xff]
        %v662 = vld [vmem:[%s3 + $0x268] sm:$0xff]
        %v663 = vld [vmem:[%s3 + $0x270] sm:$0xff]
        %v664 = vld [vmem:[%s3 + $0x278] sm:$0xff]
        %v665 = vld [vmem:[%s3 + $0x280] sm:$0xff]
        %v666 = vld [vmem:[%s3 + $0x288] sm:$0xff]
        %v667 = vld [vmem:[%s3 + $0x290] sm:$0xff]
        %v668 = vld [vmem:[%s3 + $0x298] sm:$0xff]
        %v669 = vld [vmem:[%s3 + $0x2a0] sm:$0xff]
        %v670 = vld [vmem:[%s3 + $0x2a8] sm:$0xff]
        %v671 = vld [vmem:[%s3 + $0x2b0] sm:$0xff]
        %v672 = vld [vmem:[%s3 + $0x2b8] sm:$0xff]
        %v673 = vld [vmem:[%s3 + $0x2c0] sm:$0xff]
        %v674 = vld [vmem:[%s3 + $0x2c8] sm:$0xff]
        %v675 = vld [vmem:[%s3 + $0x2d0] sm:$0xff]
        %v676 = vld [vmem:[%s3 + $0x2d8] sm:$0xff]
        %v677 = vld [vmem:[%s3 + $0x2e0] sm:$0xff]
        %v678 = vld [vmem:[%s3 + $0x2e8] sm:$0xff]
        %v679 = vld [vmem:[%s3 + $0x2f0] sm:$0xff]
        %v680 = vld [vmem:[%s3 + $0x2f8] sm:$0xff]
        %v681 = vld [vmem:[%s3 + $0x300] sm:$0xff]
        %v682 = vld [vmem:[%s3 + $0x308] sm:$0xff]
        %v683 = vld [vmem:[%s3 + $0x310] sm:$0xff]
        %v684 = vld [vmem:[%s3 + $0x318] sm:$0xff]
        %v685 = vld [vmem:[%s3 + $0x320] sm:$0xff]
        %v686 = vld [vmem:[%s3 + $0x328] sm:$0xff]
        %v687 = vld [vmem:[%s3 + $0x330] sm:$0xff]
        %v688 = vld [vmem:[%s3 + $0x338] sm:$0xff]
        %v689 = vld [vmem:[%s3 + $0x340] sm:$0xff]
        %v690 = vld [vmem:[%s3 + $0x348] sm:$0xff]
        %v691 = vld [vmem:[%s3 + $0x350] sm:$0xff]
        %v692 = vld [vmem:[%s3 + $0x358] sm:$0xff]
        %v693 = vld [vmem:[%s3 + $0x360] sm:$0xff]
        %v694 = vld [vmem:[%s3 + $0x368] sm:$0xff]
        %v695 = vld [vmem:[%s3 + $0x370] sm:$0xff]
        %v696 = vld [vmem:[%s3 + $0x378] sm:$0xff]
        %697 = vmatpush.msra.mxu0 %v600
        %698 = vmatpush.msra.mxu0 %v599
        %699 = vmatpush.msra.mxu0 %v598
        %700 = vmatpush.msra.mxu0 %v597
        %701 = vmatpush.msra.mxu0 %v596
        %702 = vmatpush.msra.mxu0 %v595
        %703 = vmatpush.msra.mxu0 %v594
        %704 = vmatpush.msra.mxu0 %v593
        %705 = vmatpush.msra.mxu0 %v592
        %706 = vmatpush.msra.mxu0 %v591
        %707 = vmatpush.msra.mxu0 %v590
        %708 = vmatpush.msra.mxu0 %v589
        %709 = vmatpush.msra.mxu0 %v588
        %710 = vmatpush.msra.mxu0 %v587
        %711 = vmatpush.msra.mxu0 %v586
        %712 = vmatpush.msra.mxu0 %v585
        %713 = vmatmul.f32.gmra.mxu0 %v578
        %v714 = vpop.f32.mrf.mxu0
        %v715 = vadd.f32 0.0, %v714
        %716 = vdwg.mxu0
        %717 = vmatpush.msra.mxu0 %v616
        %718 = vmatpush.msra.mxu0 %v615
        %719 = vmatpush.msra.mxu0 %v614
        %720 = vmatpush.msra.mxu0 %v613
        %721 = vmatpush.msra.mxu0 %v612
        %722 = vmatpush.msra.mxu0 %v611
        %723 = vmatpush.msra.mxu0 %v610
        %724 = vmatpush.msra.mxu0 %v609
        %725 = vmatpush.msra.mxu0 %v608
        %726 = vmatpush.msra.mxu0 %v607
        %727 = vmatpush.msra.mxu0 %v606
        %728 = vmatpush.msra.mxu0 %v605
        %729 = vmatpush.msra.mxu0 %v604
        %730 = vmatpush.msra.mxu0 %v603
        %731 = vmatpush.msra.mxu0 %v602
        %732 = vmatpush.msra.mxu0 %v601
        %733 = vmatmul.f32.gmra.mxu0 %v579
        %v734 = vpop.f32.mrf.mxu0
        %v735 = vadd.f32 %v715, %v734
        %736 = vdwg.mxu0
        %737 = vmatpush.msra.mxu0 %v632
        %738 = vmatpush.msra.mxu0 %v631
        %739 = vmatpush.msra.mxu0 %v630
        %740 = vmatpush.msra.mxu0 %v629
        %741 = vmatpush.msra.mxu0 %v628
        %742 = vmatpush.msra.mxu0 %v627
        %743 = vmatpush.msra.mxu0 %v626
        %744 = vmatpush.msra.mxu0 %v625
        %745 = vmatpush.msra.mxu0 %v624
        %746 = vmatpush.msra.mxu0 %v623
        %747 = vmatpush.msra.mxu0 %v622
        %748 = vmatpush.msra.mxu0 %v621
        %749 = vmatpush.msra.mxu0 %v620
        %750 = vmatpush.msra.mxu0 %v619
        %751 = vmatpush.msra.mxu0 %v618
        %752 = vmatpush.msra.mxu0 %v617
        %753 = vmatmul.f32.gmra.mxu0 %v580
        %v754 = vpop.f32.mrf.mxu0
        %v755 = vadd.f32 %v735, %v754
        %756 = vdwg.mxu0
        %757 = vmatpush.msra.mxu0 %v648
        %758 = vmatpush.msra.mxu0 %v647
        %759 = vmatpush.msra.mxu0 %v646
        %760 = vmatpush.msra.mxu0 %v645
        %761 = vmatpush.msra.mxu0 %v644
        %762 = vmatpush.msra.mxu0 %v643
        %763 = vmatpush.msra.mxu0 %v642
        %764 = vmatpush.msra.mxu0 %v641
        %765 = vmatpush.msra.mxu0 %v640
        %766 = vmatpush.msra.mxu0 %v639
        %767 = vmatpush.msra.mxu0 %v638
        %768 = vmatpush.msra.mxu0 %v637
        %769 = vmatpush.msra.mxu0 %v636
        %770 = vmatpush.msra.mxu0 %v635
        %771 = vmatpush.msra.mxu0 %v634
        %772 = vmatpush.msra.mxu0 %v633
        %773 = vmatmul.f32.gmra.mxu0 %v581
        %v774 = vpop.f32.mrf.mxu0
        %v775 = vadd.f32 %v755, %v774
        %776 = vdwg.mxu0
        %777 = vmatpush.msra.mxu0 %v664
        %778 = vmatpush.msra.mxu0 %v663
        %779 = vmatpush.msra.mxu0 %v662
        %780 = vmatpush.msra.mxu0 %v661
        %781 = vmatpush.msra.mxu0 %v660
        %782 = vmatpush.msra.mxu0 %v659
        %783 = vmatpush.msra.mxu0 %v658
        %784 = vmatpush.msra.mxu0 %v657
        %785 = vmatpush.msra.mxu0 %v656
        %786 = vmatpush.msra.mxu0 %v655
        %787 = vmatpush.msra.mxu0 %v654
        %788 = vmatpush.msra.mxu0 %v653
        %789 = vmatpush.msra.mxu0 %v652
        %790 = vmatpush.msra.mxu0 %v651
        %791 = vmatpush.msra.mxu0 %v650
        %792 = vmatpush.msra.mxu0 %v649
        %793 = vmatmul.f32.gmra.mxu0 %v582
        %v794 = vpop.f32.mrf.mxu0
        %v795 = vadd.f32 %v775, %v794
        %796 = vdwg.mxu0
        %797 = vmatpush.msra.mxu0 %v680
        %798 = vmatpush.msra.mxu0 %v679
        %799 = vmatpush.msra.mxu0 %v678
        %800 = vmatpush.msra.mxu0 %v677
        %801 = vmatpush.msra.mxu0 %v676
        %802 = vmatpush.msra.mxu0 %v675
        %803 = vmatpush.msra.mxu0 %v674
        %804 = vmatpush.msra.mxu0 %v673
        %805 = vmatpush.msra.mxu0 %v672
        %806 = vmatpush.msra.mxu0 %v671
        %807 = vmatpush.msra.mxu0 %v670
        %808 = vmatpush.msra.mxu0 %v669
        %809 = vmatpush.msra.mxu0 %v668
        %810 = vmatpush.msra.mxu0 %v667
        %811 = vmatpush.msra.mxu0 %v666
        %812 = vmatpush.msra.mxu0 %v665
        %813 = vmatmul.f32.gmra.mxu0 %v583
        %v814 = vpop.f32.mrf.mxu0
        %v815 = vadd.f32 %v795, %v814
        %816 = vdwg.mxu0
        %817 = vmatpush.msra.mxu0 %v696
        %818 = vmatpush.msra.mxu0 %v695
        %819 = vmatpush.msra.mxu0 %v694
        %820 = vmatpush.msra.mxu0 %v693
        %821 = vmatpush.msra.mxu0 %v692
        %822 = vmatpush.msra.mxu0 %v691
        %823 = vmatpush.msra.mxu0 %v690
        %824 = vmatpush.msra.mxu0 %v689
        %825 = vmatpush.msra.mxu0 %v688
        %826 = vmatpush.msra.mxu0 %v687
        %827 = vmatpush.msra.mxu0 %v686
        %828 = vmatpush.msra.mxu0 %v685
        %829 = vmatpush.msra.mxu0 %v684
        %830 = vmatpush.msra.mxu0 %v683
        %831 = vmatpush.msra.mxu0 %v682
        %832 = vmatpush.msra.mxu0 %v681
        %833 = vmatmul.f32.gmra.mxu0 %v584
        %v834 = vpop.f32.mrf.mxu0
        %v835 = vadd.f32 %v815, %v834
        %836 = vdwg.mxu0
        %v837 = vxor.u32 %v835, 2147483648
        %v838 = vmul.f32 %v837, 1.442695
        %v839 = vpow.pop %v838
        %v840 = vadd.f32 %v839, 1.0
        %v841 = vrcp.pop %v840
        %v842 = vmul.f32 %v840, %v841
        %v843 = vsub.f32 1.0, %v842
        %v844 = vmul.f32 %v841, %v843
        %v845 = vadd.f32 %v841, %v844
        %vm846 = vweird.f32 %v840
        %vm847 = vweird.f32 %v841
        %vm848 = vmor %vm846, %vm847
        %v849 = vsel %vm848, %v841, %v845
        %v850 = vand.u32 2147483647, %v840
        %vm851 = vcmp.eq.f32.partialorder %v850, 8.507059e+37
        %v852 = vand.u32 %v840, 2147483648
        %v853 = vor.u32 1.1754944e-38, %v852
        %v854 = vsel %vm851, %v853, %v849
        %v855 = vmul.f32 1.0, %v854
        %v856 = vlaneseq
        %vm857 = vcmp.ge.s32.totalorder %v856, 0
        %vm858 = vcmp.lt.s32.totalorder %v856, 64
        %vm859 = vmand %vm857, %vm858
        %860 = vst.msk [vmem:[#allocation3] sm:$0x1] %vm859, %v855
        %862 = vst [vmem:[#allocation1] sm:$0xff] %v855
        %s863 = scalar_lea.vmem [#allocation1], 1
        %v864 = vld [vmem:[%s863] ss:$9 sm:$0xff]
        %865 = vrot.lane.b32.xlu0 %v864, 64
        %v866 = vpop.permute.xlu0 %865
        %vm868 = vcmp.ge.s32.totalorder %v856, 64
        %vm869 = vcmp.lt.s32.totalorder %v856, 128
        %vm870 = vmand %vm868, %vm869
        %871 = vst.msk [vmem:[#allocation3] sm:$0x1] %vm870, %v866
        %872 = vst [vmem:[#allocation1] sm:$0xff] %v855
        %s873 = scalar_lea.vmem [#allocation1], 2
        %v874 = vld [vmem:[%s873] ss:$9 sm:$0xff]
        %876 = vst.msk [vmem:[#allocation3 + $0x1] sm:$0x1] %vm859, %v874
        %877 = vst [vmem:[#allocation1] sm:$0xff] %v855
        %s878 = scalar_lea.vmem [#allocation1], 3
        %v879 = vld [vmem:[%s878] ss:$9 sm:$0xff]
        %880 = vrot.lane.b32.xlu0 %v879, 64
        %v881 = vpop.permute.xlu0 %880
        %883 = vst.msk [vmem:[#allocation3 + $0x1] sm:$0x1] %vm870, %v881
        %884 = vst [vmem:[#allocation1] sm:$0xff] %v855
        %s885 = scalar_lea.vmem [#allocation1], 4
        %v886 = vld [vmem:[%s885] ss:$9 sm:$0xff]
        %888 = vst.msk [vmem:[#allocation3 + $0x2] sm:$0x1] %vm859, %v886
        %889 = vst [vmem:[#allocation1] sm:$0xff] %v855
        %s890 = scalar_lea.vmem [#allocation1], 5
        %v891 = vld [vmem:[%s890] ss:$9 sm:$0xff]
        %892 = vrot.lane.b32.xlu0 %v891, 64
        %v893 = vpop.permute.xlu0 %892
        %895 = vst.msk [vmem:[#allocation3 + $0x2] sm:$0x1] %vm870, %v893
        %896 = vst [vmem:[#allocation1] sm:$0xff] %v855
        %s897 = scalar_lea.vmem [#allocation1], 6
        %v898 = vld [vmem:[%s897] ss:$9 sm:$0xff]
        %900 = vst.msk [vmem:[#allocation3 + $0x3] sm:$0x1] %vm859, %v898
        %901 = vst [vmem:[#allocation1] sm:$0xff] %v855
        %s902 = scalar_lea.vmem [#allocation1], 7
        %v903 = vld [vmem:[%s902] ss:$9 sm:$0xff]
        %904 = vrot.lane.b32.xlu0 %v903, 64
        %v905 = vpop.permute.xlu0 %904
        %907 = vst.msk [vmem:[#allocation3 + $0x3] sm:$0x1] %vm870, %v905
        %v908 = vld [vmem:[#allocation3] sm:$0xf]
        %v909 = vld [vmem:[%s195] sm:$0xff]
        %v910 = vld [vmem:[%s195 + $0x8] sm:$0xff]
        %v911 = vld [vmem:[%s195 + $0x10] sm:$0xff]
        %v912 = vld [vmem:[%s195 + $0x18] sm:$0xff]
        %v913 = vld [vmem:[%s195 + $0x20] sm:$0xff]
        %v914 = vld [vmem:[%s195 + $0x28] sm:$0xff]
        %v915 = vld [vmem:[%s195 + $0x30] sm:$0xff]
        %v916 = vld [vmem:[%s195 + $0x38] sm:$0xff]
        %v917 = vld [vmem:[%s195 + $0x40] sm:$0xff]
        %v918 = vld [vmem:[%s195 + $0x48] sm:$0xff]
        %v919 = vld [vmem:[%s195 + $0x50] sm:$0xff]
        %v920 = vld [vmem:[%s195 + $0x58] sm:$0xff]
        %v921 = vld [vmem:[%s195 + $0x60] sm:$0xff]
        %v922 = vld [vmem:[%s195 + $0x68] sm:$0xff]
        %v923 = vld [vmem:[%s195 + $0x70] sm:$0xff]
        %v924 = vld [vmem:[%s195 + $0x78] sm:$0xff]
        %v925 = vmul.f32 %v909, %v417
        %v926 = vmul.f32 %v910, %v417
        %v927 = vmul.f32 %v911, %v417
        %v928 = vmul.f32 %v912, %v417
        %v929 = vmul.f32 %v913, %v422
        %v930 = vmul.f32 %v914, %v422
        %v931 = vmul.f32 %v915, %v422
        %v932 = vmul.f32 %v916, %v422
        %v933 = vmul.f32 %v917, %v427
        %v934 = vmul.f32 %v918, %v427
        %v935 = vmul.f32 %v919, %v427
        %v936 = vmul.f32 %v920, %v427
        %v937 = vmul.f32 %v921, %v432
        %v938 = vmul.f32 %v922, %v432
        %v939 = vmul.f32 %v923, %v432
        %v940 = vmul.f32 %v924, %v432
        %v942 = vperm.slane %v908, 0
        %v943 = vperm.slane %v908, 1
        %v944 = vperm.slane %v908, 2
        %v945 = vperm.slane %v908, 3
        %v950 = vmul.f32 %v925, %v942
        %v951 = vmul.f32 %v926, %v943
        %v952 = vmul.f32 %v927, %v944
        %v953 = vmul.f32 %v928, %v945
        %v954 = vmul.f32 %v929, %v942
        %v955 = vmul.f32 %v930, %v943
        %v956 = vmul.f32 %v931, %v944
        %v957 = vmul.f32 %v932, %v945
        %v958 = vmul.f32 %v933, %v942
        %v959 = vmul.f32 %v934, %v943
        %v960 = vmul.f32 %v935, %v944
        %v961 = vmul.f32 %v936, %v945
        %v962 = vmul.f32 %v937, %v942
        %v963 = vmul.f32 %v938, %v943
        %v964 = vmul.f32 %v939, %v944
        %v965 = vmul.f32 %v940, %v945
        %966 = vst [vmem:[%s190] sm:$0xff] %v950
        %967 = vst [vmem:[%s190 + $0x8] sm:$0xff] %v951
        %968 = vst [vmem:[%s190 + $0x10] sm:$0xff] %v952
        %969 = vst [vmem:[%s190 + $0x18] sm:$0xff] %v953
        %970 = vst [vmem:[%s190 + $0x20] sm:$0xff] %v954
        %971 = vst [vmem:[%s190 + $0x28] sm:$0xff] %v955
        %972 = vst [vmem:[%s190 + $0x30] sm:$0xff] %v956
        %973 = vst [vmem:[%s190 + $0x38] sm:$0xff] %v957
        %974 = vst [vmem:[%s190 + $0x40] sm:$0xff] %v958
        %975 = vst [vmem:[%s190 + $0x48] sm:$0xff] %v959
        %976 = vst [vmem:[%s190 + $0x50] sm:$0xff] %v960
        %977 = vst [vmem:[%s190 + $0x58] sm:$0xff] %v961
        %978 = vst [vmem:[%s190 + $0x60] sm:$0xff] %v962
        %979 = vst [vmem:[%s190 + $0x68] sm:$0xff] %v963
        %980 = vst [vmem:[%s190 + $0x70] sm:$0xff] %v964
        %981 = vst [vmem:[%s190 + $0x78] sm:$0xff] %v965
        %s982 = sand.u32 %s115, 1
        %s983 = scalar_lea.sflag [#allocation5], %s982
        %s984 = sand.u32 %s115, 1
        %s985 = smul.addr %s984, 128
        %s986 = scalar_lea.vmem [#allocation4], %s985
        // Predicated region
        $region37: #{tpu_custom_call.1} parent=35 // pred_check
          %p987 = pneg %p125
        $region38: #{tpu_custom_call.1} parent=35 // pred_check_branch
          %989 = sbr.rel (%p987) target = $region40
        $region39: #{tpu_custom_call.1} parent=35 // pred_region
          %991 = vsyncadd %s983, 0
          %s992 = smul.addr %s18, 16
          %s993 = smul.addr %s992, 8
          %s994 = scalar_lea.hbm %s4, %s993
          %s995 = sshll.u32 %s986, 4
          %s996 = int_to_ptr.vmem [resolvable:$true] %s995
          %s997 = sshll.u32 %s994, 4
          %s998 = int_to_ptr.hbm [resolvable:$true] %s997
          %1003 = dma.vmem_to_hbm [thread:$0]  %s996, 2048, %s998, %s983, 512, 512, 32
        $region40: #{tpu_custom_call.1} parent=35 // pred_fallthru
          _
      $region36: #{tpu_custom_call.1} parent=5 // pred_fallthru
        _
      %p1004 = scmp.le.s32.totalorder 2, %s13
      // Predicated region
      $region41: #{tpu_custom_call.1} parent=5 // pred_check
        %p1005 = pneg %p1004
      $region42: #{tpu_custom_call.1} parent=5 // pred_check_branch
        %1007 = sbr.rel (%p1005) target = $region44
      $region43: #{tpu_custom_call.1} parent=5 // pred_region
        %s1008 = ssub.s32 %s13, 2
        // Predicated region
        $region45: #{tpu_custom_call.1} parent=43 // pred_check
          %p1009 = pneg %p131
        $region46: #{tpu_custom_call.1} parent=43 // pred_check_branch
          %1011 = sbr.rel (%p1009) target = $region48
        $region47: #{tpu_custom_call.1} parent=43 // pred_region
          %s1012 = sand.u32 %s116, 1
          %s1013 = scalar_lea.sflag [#allocation5], %s1012
          %s1014 = sand.u32 %s116, 1
          %s1015 = smul.addr %s1014, 128
          %s1016 = scalar_lea.vmem [#allocation4], %s1015
          %1018 = dma.done %s1013, 2048
        $region48: #{tpu_custom_call.1} parent=43 // pred_fallthru
          _
      $region44: #{tpu_custom_call.1} parent=5 // pred_fallthru
        _
    $region6: #{tpu_custom_call.1} parent=1 // loop_footer
      %s17 = sadd.s32 1, %s13
    $region7: #{tpu_custom_call.1} parent=1 // loop_footer_branch
      %12 = sbr.rel target = $region3
    $region8: #{tpu_custom_call.1} parent=1 // loop_exit
      _
    %1019 = vsyncpa [#allocation5], 1
    %s1020 = scalar_lea.sflag [#allocation5], 1
    %1021 = vsyncpa %s1020, 1

</llo_original>
